<compile_context>
chip_gen: v7x
topology: tpu7x:2x2x1
jax: 0.10.0
libtpu: 0.0.40
codegen_flags: <defaults>
</compile_context>

<pallas_src>
import functools

import jax
import jax.numpy as jnp
from jax.experimental import pallas as pl
from jax.experimental.pallas import tpu as pltpu


def _round_up(x, m):
    return (x + m - 1) // m * m


def _self_output_kernel(x_ref, w_ref, b_ref, o_ref):
    # x_ref: (tm, Dp), w_ref: (Dp, Dp) resident, b_ref: (1, Dp), o_ref: (tm, Dp)
    acc = jnp.dot(x_ref[...], w_ref[...], preferred_element_type=jnp.float32)
    acc = acc + b_ref[...].astype(jnp.float32)
    o_ref[...] = acc.astype(o_ref.dtype)


def prepare_self_output_params(weight, bias, compute_dtype=None):
    """One-time param prep: PyTorch nn.Linear (out, in) -> (in, out), padded to
    a 128-multiple feature dim so the per-call path does zero weight work.

    Optionally cast the weight (e.g. to bf16 on v6e/v7x) -- accumulation stays
    in f32 inside the kernel via preferred_element_type.
    """
    d_out, d_in = weight.shape
    d_pad = max(_round_up(d_in, 128), 128)
    w_t = weight.T                      # (in, out)
    b = bias.reshape(1, d_out)
    if d_pad != d_in or d_pad != d_out:
        w_t = jnp.pad(w_t, ((0, d_pad - d_in), (0, d_pad - d_out)))
        b = jnp.pad(b, ((0, 0), (0, d_pad - d_out)))
    if compute_dtype is not None:
        w_t = w_t.astype(compute_dtype)
    return w_t, b


@functools.partial(jax.jit, static_argnames=("tile_m",))
def donut_swin_self_output(hidden_states, input_tensor, weight_t, bias_p, *, tile_m=512):
    """hidden_states: (B, S, D); input_tensor is unused (matches PyTorch forward).

    weight_t: (D_pad, D_pad) pre-transposed (in, out) + pre-padded weight.
    bias_p:   (1, D_pad)     pre-padded bias.
    """
    del input_tensor  # DonutSwinSelfOutput.forward ignores it

    B, S, D = hidden_states.shape
    M = B * S
    dtype = hidden_states.dtype
    itemsize = jnp.dtype(dtype).itemsize
    D_pad = weight_t.shape[0]

    # Dtype-aware row alignment: 8 (f32), 16 (bf16), 32 (int8/fp8).
    align = max(8, 32 // itemsize)

    # Row tile: large (amortizes ~0.35us/step overhead), clamped to the problem.
    tm = min(int(tile_m), _round_up(M, align))
    tm = max(_round_up(tm, align), align)

    # Keep the resident footprint (x + out double-buffered, weight + bias
    # conservatively counted twice) under the VMEM cap.
    vmem_cap = 40 * 1024 * 1024

    def _footprint(rows):
        return (4 * rows * D_pad + 2 * D_pad * D_pad + 2 * D_pad) * itemsize

    while _footprint(tm) > vmem_cap and tm > align:
        tm = max(_round_up(tm // 2, align), align)

    # v7x megacore: make sure there are >= 2 row tiles so both TCs get work.
    if pl.cdiv(M, tm) == 1 and tm >= 2 * align:
        tm = _round_up(tm // 2, align)

    num_m_tiles = pl.cdiv(M, tm)

    # Activation feature padding: a no-op for real Swin dims (multiples of 128).
    x2d = hidden_states.reshape(M, D)
    if D_pad != D:
        x2d = jnp.pad(x2d, ((0, 0), (0, D_pad - D)))

    # Advisory cost (accurate now that the weight is fetched exactly once).
    cost = pl.CostEstimate(
        flops=2 * M * D_pad * D_pad,
        transcendentals=0,
        bytes_accessed=(2 * M * D_pad + D_pad * D_pad + D_pad) * itemsize,
    )

    vmem_limit = int(min(max(_footprint(tm) + _footprint(tm) // 4,
                             16 * 1024 * 1024), vmem_cap))

    out2d = pl.pallas_call(
        _self_output_kernel,
        out_shape=jax.ShapeDtypeStruct((M, D_pad), dtype),
        grid_spec=pltpu.PrefetchScalarGridSpec(
            num_scalar_prefetch=0,
            grid=(num_m_tiles,),
            in_specs=[
                pl.BlockSpec((tm, D_pad), lambda i: (i, 0)),        # row tile of x
                pl.BlockSpec((D_pad, D_pad), lambda i: (0, 0)),     # resident W^T
                pl.BlockSpec((1, D_pad), lambda i: (0, 0)),         # resident bias
            ],
            out_specs=pl.BlockSpec((tm, D_pad), lambda i: (i, 0)),
        ),
        compiler_params=pltpu.CompilerParams(
            dimension_semantics=("parallel",),
            vmem_limit_bytes=vmem_limit,
        ),
        cost_estimate=cost,
    )(x2d, weight_t, bias_p)

    if D_pad != D:
        out2d = out2d[:, :D]
    return out2d.reshape(B, S, D)


if __name__ == "__main__":
    # Small shapes consistent with the module: batch=2, seq=8, hidden dim=32.
    B, S, D = 2, 8, 32
    key = jax.random.PRNGKey(0)
    k_x, k_w, k_b, k_res = jax.random.split(key, 4)

    hidden_states = jax.random.normal(k_x, (B, S, D), dtype=jnp.float32)
    input_tensor = jax.random.normal(k_res, (B, S, D), dtype=jnp.float32)  # ignored
    # Deterministic "Linear(dim, dim)" params (PyTorch convention: (out, in)).
    weight = jax.random.normal(k_w, (D, D), dtype=jnp.float32) * 0.02
    bias = jax.random.normal(k_b, (D,), dtype=jnp.float32) * 0.01

    # One-time parameter prep (transpose + padding hoisted out of the forward).
    weight_t, bias_p = prepare_self_output_params(weight, bias)

    out = donut_swin_self_output(hidden_states, input_tensor, weight_t, bias_p)
    out = jax.block_until_ready(out)

    # Reference check in plain JAX (same math as nn.Linear).
    ref = (hidden_states.reshape(-1, D) @ weight.T + bias).reshape(B, S, D)
    assert out.shape == (B, S, D)
    assert jnp.allclose(out, ref, atol=1e-5, rtol=1e-5)

    print("KERNEL_OK")
</pallas_src>

<mosaic_0001>
module attributes {stable_mosaic.version = 11 : i64} {
  func.func @_self_output_kernel(%arg0: i32, %arg1: memref<8x128xf32, #tpu.memory_space<vmem>>, %arg2: memref<128x128xf32, #tpu.memory_space<vmem>>, %arg3: memref<1x128xf32, #tpu.memory_space<vmem>>, %arg4: memref<8x128xf32, #tpu.memory_space<vmem>>) attributes {dimension_semantics = [#tpu.dimension_semantics<parallel>], iteration_bounds = array<i64: 2>, scalar_prefetch = 0 : i64, scratch_operands = 0 : i64, tpu.core_type = #tpu.core_type<tc>, window_params = [{transform_indices = @transform_0, window_bounds = array<i64: 8, 128>}, {pipeline_mode = #tpu.pipeline_mode<synchronous>, transform_indices = @transform_1, window_bounds = array<i64: 128, 128>}, {pipeline_mode = #tpu.pipeline_mode<synchronous>, transform_indices = @transform_2, window_bounds = array<i64: 1, 128>}, {transform_indices = @transform_3, window_bounds = array<i64: 8, 128>}]} {
    %c0 = arith.constant 0 : index
    %c0_0 = arith.constant 0 : index
    %0 = vector.load %arg1[%c0, %c0_0] : memref<8x128xf32, #tpu.memory_space<vmem>>, vector<8x128xf32>
    %c0_1 = arith.constant 0 : index
    %c0_2 = arith.constant 0 : index
    %1 = vector.load %arg2[%c0_1, %c0_2] : memref<128x128xf32, #tpu.memory_space<vmem>>, vector<128x128xf32>
    %cst = arith.constant dense<0.000000e+00> : vector<8x128xf32>
    %2 = tpu.matmul %0, %1, %cst {dimension_numbers = #tpu.dot_dimension_numbers<[1], [0], [0], [1], [0, 0, 1, 1], [], []>} : vector<8x128xf32>, vector<128x128xf32>, vector<8x128xf32> -> vector<8x128xf32>
    %c0_3 = arith.constant 0 : index
    %c0_4 = arith.constant 0 : index
    %3 = vector.load %arg3[%c0_3, %c0_4] : memref<1x128xf32, #tpu.memory_space<vmem>>, vector<1x128xf32>
    %4 = vector.broadcast %3 : vector<1x128xf32> to vector<8x128xf32>
    %5 = arith.addf %2, %4 : vector<8x128xf32>
    %c0_5 = arith.constant 0 : index
    %c0_6 = arith.constant 0 : index
    %6 = vector.load %arg4[%c0_5, %c0_6] : memref<8x128xf32, #tpu.memory_space<vmem>>, vector<8x128xf32>
    tpu.vector_store %arg4[%c0_5, %c0_6], %5 {strides = array<i32>} : memref<8x128xf32, #tpu.memory_space<vmem>>, vector<8x128xf32>,
    return
  }
  func.func @transform_0(%arg0: i32) -> (i32, i32) {
    %c0_i32 = arith.constant 0 : i32
    %c0_i32_0 = arith.constant 0 : i32
    return %arg0, %c0_i32 : i32, i32
  }
  func.func @transform_1(%arg0: i32) -> (i32, i32) {
    %c0_i32 = arith.constant 0 : i32
    %c0_i32_0 = arith.constant 0 : i32
    %c0_i32_1 = arith.constant 0 : i32
    return %c0_i32, %c0_i32_0 : i32, i32
  }
  func.func @transform_2(%arg0: i32) -> (i32, i32) {
    %c0_i32 = arith.constant 0 : i32
    %c0_i32_0 = arith.constant 0 : i32
    %c0_i32_1 = arith.constant 0 : i32
    return %c0_i32, %c0_i32_0 : i32, i32
  }
  func.func @transform_3(%arg0: i32) -> (i32, i32) {
    %c0_i32 = arith.constant 0 : i32
    %c0_i32_0 = arith.constant 0 : i32
    return %arg0, %c0_i32 : i32, i32
  }
}

</mosaic_0001>

<llo_original>
// kernel: donut_swin_self_output.1
$region0: #{donut_swin_self_output.1}
  #allocation0 [shape = 'u32[]', space=smem, size = 0x4, offset = 0x4, fixed_abs, tag = 'smem constant byte address 0x4 - core index']
  #allocation1 [shape = 'u32[144,128]{1,0:T(1,128)}', space=vmem, size = 0x12000, scoped, tag = 'internal scratch']
  %s0 = inlined_call_operand.vmem [shape: f32[16,128], index: 0, kind: input, shape index: {}]
  %s1 = inlined_call_operand.hbm [shape: f32[128,128], index: 1, kind: input, shape index: {}]
  %s2 = inlined_call_operand.vmem [shape: f32[1,128], index: 2, kind: input, shape index: {}]
  %s3 = inlined_call_operand.vmem [shape: f32[16,128], index: 3, kind: output, shape index: {}]
  %s4 = sld [smem:[#allocation0]]
  $region49: #{donut_swin_self_output.1} parent=0
    _
  %s6 = ssub.s32 1, %s4
  %s7 = scalar_select 0, %s6, %s4
  $region1: #{donut_swin_self_output.1} parent=0
    #allocation2 [shape = 'u8[65536]{0}', space=vmem, size = 0x10000, scoped, tag = 'input window, operand 1, single buffered']
    #allocation3 [shape = 's32[2]{0}', space=sflag, size = 0x8, scoped, tag = 'scoped memory for donut_swin_self_output.1']
    %8 = vsyncpa [#allocation3], 0
    loop: start=0, step=1, limit=4
    $region2: #{donut_swin_self_output.1} parent=1 // loop_pre_header
      _
    $region3: #{donut_swin_self_output.1} parent=1 // loop_header
      %s10 = sphi 0, %s14
      %p11 = scmp.ge.s32.totalorder %s10, 4
      %s20 = sphi 0, %s22
      %s23 = sphi 0, %s20
      %s24 = sphi 0, %s23
      %s40 = sphi 0, %s24
      %s44 = sphi 0, %s44
      %s46 = sphi 0, %s44
      %s47 = sphi 0, %s46
      %s61 = sphi 0, %s47
      %s65 = sphi 0, %s65
      %s67 = sphi 0, %s65
      %s68 = sphi 0, %s67
      %s82 = sphi 0, %s68
      %s88 = sphi 0, %s90
      %s91 = sphi 0, %s88
      %s92 = sphi 0, %s91
      %s108 = sphi 0, %s92
    $region4: #{donut_swin_self_output.1} parent=1 // loop_header_branch
      %13 = sbr.rel (%p11) target = $region8
    $region5: #{donut_swin_self_output.1} parent=1 // loop_body
      %s15 = ssub.s32 %s10, 1
      %s16 = ssub.s32 %s10, 2
      %s17 = sadd.s32 %s10, 1
      %s18 = ssub.s32 %s10, %s17
      %p19 = scmp.eq.s32.totalorder %s18, 0
      %s21 = sadd.s32 %s20, 1
      %s22 = scalar_select %p19, %s20, %s21
      %p25 = pneg %p19
      %p26 = scmp.eq.s32.totalorder %s10, 1
      %p27 = por %p25, %p26
      %p28 = scmp.ne.s32.totalorder %s20, %s23
      %p29 = scmp.eq.s32.totalorder %s10, 0
      %p30 = por %p28, %p29
      %p31 = scmp.ne.s32.totalorder %s20, %s23
      %p32 = scmp.eq.s32.totalorder %s15, 1
      %p33 = por %p31, %p32
      %p34 = scmp.ne.s32.totalorder %s23, %s24
      %p35 = scmp.eq.s32.totalorder %s15, 0
      %p36 = por %p34, %p35
      %p37 = scmp.ne.s32.totalorder %s23, %s24
      %p38 = scmp.eq.s32.totalorder %s16, 1
      %p39 = por %p37, %p38
      %p41 = scmp.ne.s32.totalorder %s24, %s40
      %p42 = scmp.eq.s32.totalorder %s16, 0
      %p43 = por %p41, %p42
      %s45 = sadd.s32 %s44, 1
      %p48 = scmp.eq.s32.totalorder %s10, 1
      %p49 = scmp.ne.s32.totalorder %s44, %s46
      %p50 = scmp.eq.s32.totalorder %s10, 0
      %p51 = por %p49, %p50
      %p52 = scmp.ne.s32.totalorder %s44, %s46
      %p53 = scmp.eq.s32.totalorder %s15, 1
      %p54 = por %p52, %p53
      %p55 = scmp.ne.s32.totalorder %s46, %s47
      %p56 = scmp.eq.s32.totalorder %s15, 0
      %p57 = por %p55, %p56
      %p58 = scmp.ne.s32.totalorder %s46, %s47
      %p59 = scmp.eq.s32.totalorder %s16, 1
      %p60 = por %p58, %p59
      %p62 = scmp.ne.s32.totalorder %s47, %s61
      %p63 = scmp.eq.s32.totalorder %s16, 0
      %p64 = por %p62, %p63
      %s66 = sadd.s32 %s65, 1
      %p69 = scmp.eq.s32.totalorder %s10, 1
      %p70 = scmp.ne.s32.totalorder %s65, %s67
      %p71 = scmp.eq.s32.totalorder %s10, 0
      %p72 = por %p70, %p71
      %p73 = scmp.ne.s32.totalorder %s65, %s67
      %p74 = scmp.eq.s32.totalorder %s15, 1
      %p75 = por %p73, %p74
      %p76 = scmp.ne.s32.totalorder %s67, %s68
      %p77 = scmp.eq.s32.totalorder %s15, 0
      %p78 = por %p76, %p77
      %p79 = scmp.ne.s32.totalorder %s67, %s68
      %p80 = scmp.eq.s32.totalorder %s16, 1
      %p81 = por %p79, %p80
      %p83 = scmp.ne.s32.totalorder %s68, %s82
      %p84 = scmp.eq.s32.totalorder %s16, 0
      %p85 = por %p83, %p84
      %s86 = ssub.s32 %s10, %s17
      %p87 = scmp.eq.s32.totalorder %s86, 0
      %s89 = sadd.s32 %s88, 1
      %s90 = scalar_select %p87, %s88, %s89
      %p93 = pneg %p87
      %p94 = scmp.eq.s32.totalorder %s10, 1
      %p95 = por %p93, %p94
      %p96 = scmp.ne.s32.totalorder %s88, %s91
      %p97 = scmp.eq.s32.totalorder %s10, 0
      %p98 = por %p96, %p97
      %p99 = scmp.ne.s32.totalorder %s88, %s91
      %p100 = scmp.eq.s32.totalorder %s15, 1
      %p101 = por %p99, %p100
      %p102 = scmp.ne.s32.totalorder %s91, %s92
      %p103 = scmp.eq.s32.totalorder %s15, 0
      %p104 = por %p102, %p103
      %p105 = scmp.ne.s32.totalorder %s91, %s92
      %p106 = scmp.eq.s32.totalorder %s16, 1
      %p107 = por %p105, %p106
      %p109 = scmp.ne.s32.totalorder %s92, %s108
      %p110 = scmp.eq.s32.totalorder %s16, 0
      %p111 = por %p109, %p110
      %p112 = scmp.le.s32.totalorder 1, %s10
      %p113 = scmp.lt.s32.totalorder %s10, 3
      %p114 = pnand %p112, %p113
      %p115 = pneg %p114
      // Predicated region
      $region9: #{donut_swin_self_output.1} parent=5 // pred_check
        _
      $region10: #{donut_swin_self_output.1} parent=5 // pred_check_branch
        %117 = sbr.rel (%p114) target = $region12
      $region11: #{donut_swin_self_output.1} parent=5 // pred_region
        %s118 = ssub.s32 %s10, 1
        // Predicated region
        $region13: #{donut_swin_self_output.1} parent=11 // pred_check
          %p119 = pneg %p57
        $region14: #{donut_swin_self_output.1} parent=11 // pred_check_branch
          %121 = sbr.rel (%p119) target = $region16
        $region15: #{donut_swin_self_output.1} parent=11 // pred_region
          %s123 = ssub.s32 2048, 2048
          %124 = vsyncadd [#allocation3], %s123
          %s125 = sshll.u32 [#allocation2], 4
          %s126 = int_to_ptr.vmem [resolvable:$true] %s125
          %131 = dma.hbm_to_vmem [thread:$0]  %s1, 2048, %s126, [#allocation3], 128, 128, 8
        $region16: #{donut_swin_self_output.1} parent=11 // pred_fallthru
          _
        // Predicated region
        $region17: #{donut_swin_self_output.1} parent=11 // pred_check
          %p132 = pneg %p78
        $region18: #{donut_swin_self_output.1} parent=11 // pred_check_branch
          %134 = sbr.rel (%p132) target = $region20
        $region19: #{donut_swin_self_output.1} parent=11 // pred_region
          _
        $region20: #{donut_swin_self_output.1} parent=11 // pred_fallthru
          _
      $region12: #{donut_swin_self_output.1} parent=5 // pred_fallthru
        _
      %p135 = scmp.lt.s32.totalorder %s10, 2
      // Predicated region
      $region21: #{donut_swin_self_output.1} parent=5 // pred_check
        %p136 = pneg %p135
      $region22: #{donut_swin_self_output.1} parent=5 // pred_check_branch
        %138 = sbr.rel (%p136) target = $region24
      $region23: #{donut_swin_self_output.1} parent=5 // pred_region
        // Predicated region
        $region25: #{donut_swin_self_output.1} parent=23 // pred_check
          %p139 = pneg %p30
        $region26: #{donut_swin_self_output.1} parent=23 // pred_check_branch
          %141 = sbr.rel (%p139) target = $region28
        $region27: #{donut_swin_self_output.1} parent=23 // pred_region
          %p142 = scmp.lt.s32.totalorder %s10, 1
          %s143 = scalar_select %p142, %s10, 1
          %s144 = smul.addr %s143, 8
          %s145 = scalar_lea.vmem %s0, %s144
        $region28: #{donut_swin_self_output.1} parent=23 // pred_fallthru
          _
      $region24: #{donut_swin_self_output.1} parent=5 // pred_fallthru
        _
      %p146 = scmp.le.s32.totalorder 1, %s10
      %p147 = scmp.lt.s32.totalorder %s10, 3
      %p148 = pnand %p146, %p147
      %p149 = pneg %p148
      // Predicated region
      $region29: #{donut_swin_self_output.1} parent=5 // pred_check
        _
      $region30: #{donut_swin_self_output.1} parent=5 // pred_check_branch
        %151 = sbr.rel (%p148) target = $region32
      $region31: #{donut_swin_self_output.1} parent=5 // pred_region
        %s152 = ssub.s32 %s10, 1
        // Predicated region
        $region33: #{donut_swin_self_output.1} parent=31 // pred_check
          %p153 = pneg %p57
        $region34: #{donut_swin_self_output.1} parent=31 // pred_check_branch
          %155 = sbr.rel (%p153) target = $region36
        $region35: #{donut_swin_self_output.1} parent=31 // pred_region
          %156 = dma.done [#allocation3], 2048
        $region36: #{donut_swin_self_output.1} parent=31 // pred_fallthru
          _
        %p157 = scmp.lt.s32.totalorder %s15, 1
        %s158 = scalar_select %p157, %s15, 1
        %s159 = smul.addr %s158, 8
        %s160 = scalar_lea.vmem %s0, %s159
        %p161 = pneg %p36
        %p162 = pneg %p33
        %p163 = pneg %p57
        %p164 = pneg %p54
        %p165 = pneg %p78
        %p166 = pneg %p75
        %p167 = pneg %p104
        %p168 = pneg %p101
        %p169 = scmp.lt.s32.totalorder %s15, 1
        %s170 = scalar_select %p169, %s15, 1
        %s171 = smul.addr %s170, 8
        %s172 = scalar_lea.vmem %s3, %s171
        %p173 = scmp.lt.s32.totalorder %s15, 1
        %s174 = scalar_select %p173, %s15, 1
        %s175 = smul.addr %s174, 8
        %s176 = scalar_lea.vmem %s0, %s175
        %p177 = scmp.lt.s32.totalorder %s15, 1
        %s178 = scalar_select %p177, %s15, 1
        %s179 = smul.addr %s178, 8
        %s180 = scalar_lea.vmem %s3, %s179
        %v181 = vld [vmem:[%s176] sm:$0xff]
        %v182 = vld [vmem:[#allocation2] sm:$0xff]
        %v183 = vld [vmem:[#allocation2 + $0x8] sm:$0xff]
        %v184 = vld [vmem:[#allocation2 + $0x10] sm:$0xff]
        %v185 = vld [vmem:[#allocation2 + $0x18] sm:$0xff]
        %v186 = vld [vmem:[#allocation2 + $0x20] sm:$0xff]
        %v187 = vld [vmem:[#allocation2 + $0x28] sm:$0xff]
        %v188 = vld [vmem:[#allocation2 + $0x30] sm:$0xff]
        %v189 = vld [vmem:[#allocation2 + $0x38] sm:$0xff]
        %v190 = vld [vmem:[#allocation2 + $0x40] sm:$0xff]
        %v191 = vld [vmem:[#allocation2 + $0x48] sm:$0xff]
        %v192 = vld [vmem:[#allocation2 + $0x50] sm:$0xff]
        %v193 = vld [vmem:[#allocation2 + $0x58] sm:$0xff]
        %v194 = vld [vmem:[#allocation2 + $0x60] sm:$0xff]
        %v195 = vld [vmem:[#allocation2 + $0x68] sm:$0xff]
        %v196 = vld [vmem:[#allocation2 + $0x70] sm:$0xff]
        %v197 = vld [vmem:[#allocation2 + $0x78] sm:$0xff]
        %v198 = vld [vmem:[%s2] sm:$0x1]
        %v200 = vlaneseq
        %v201 = vshrl.u32 %v200, 7
        %v202 = vsub.s32 0, %v201
        %v203 = vrot.slane %v198, %v202
        %205 = vmatprep.subr.mxu0 0.0
        %206 = vmatpush1.msra.mxu0 %v182
        %207 = vmatprep.subr.mxu0 0.0
        %208 = vmatpush1.msra.mxu0 %v183
        %209 = vmatprep.subr.mxu0 0.0
        %210 = vmatpush1.msra.mxu0 %v184
        %211 = vmatprep.subr.mxu0 0.0
        %212 = vmatpush1.msra.mxu0 %v185
        %213 = vmatprep.subr.mxu0 0.0
        %214 = vmatpush1.msra.mxu0 %v186
        %215 = vmatprep.subr.mxu0 0.0
        %216 = vmatpush1.msra.mxu0 %v187
        %217 = vmatprep.subr.mxu0 0.0
        %218 = vmatpush1.msra.mxu0 %v188
        %219 = vmatprep.subr.mxu0 0.0
        %220 = vmatpush1.msra.mxu0 %v189
        %221 = vmatprep.subr.mxu0 0.0
        %222 = vmatpush1.msra.mxu0 %v190
        %223 = vmatprep.subr.mxu0 0.0
        %224 = vmatpush1.msra.mxu0 %v191
        %225 = vmatprep.subr.mxu0 0.0
        %226 = vmatpush1.msra.mxu0 %v192
        %227 = vmatprep.subr.mxu0 0.0
        %228 = vmatpush1.msra.mxu0 %v193
        %229 = vmatprep.subr.mxu0 0.0
        %230 = vmatpush1.msra.mxu0 %v194
        %231 = vmatprep.subr.mxu0 0.0
        %232 = vmatpush1.msra.mxu0 %v195
        %233 = vmatprep.subr.mxu0 0.0
        %234 = vmatpush1.msra.mxu0 %v196
        %235 = vmatprep.subr.mxu0 0.0
        %236 = vmatpush1.msra.mxu0 %v197
        %237 = vmatprep.subr.mxu0 0.0
        %238 = vmatpush1.msra.mxu0 0.0
        %239 = vmatprep.subr.mxu0 0.0
        %240 = vmatpush1.msra.mxu0 0.0
        %241 = vmatprep.subr.mxu0 0.0
        %242 = vmatpush1.msra.mxu0 0.0
        %243 = vmatprep.subr.mxu0 0.0
        %244 = vmatpush1.msra.mxu0 0.0
        %245 = vmatprep.subr.mxu0 0.0
        %246 = vmatpush1.msra.mxu0 0.0
        %247 = vmatprep.subr.mxu0 0.0
        %248 = vmatpush1.msra.mxu0 0.0
        %249 = vmatprep.subr.mxu0 0.0
        %250 = vmatpush1.msra.mxu0 0.0
        %251 = vmatprep.subr.mxu0 0.0
        %252 = vmatpush1.msra.mxu0 0.0
        %253 = vmatprep.subr.mxu0 0.0
        %254 = vmatpush1.msra.mxu0 0.0
        %255 = vmatprep.subr.mxu0 0.0
        %256 = vmatpush1.msra.mxu0 0.0
        %257 = vmatprep.subr.mxu0 0.0
        %258 = vmatpush1.msra.mxu0 0.0
        %259 = vmatprep.subr.mxu0 0.0
        %260 = vmatpush1.msra.mxu0 0.0
        %261 = vmatprep.subr.mxu0 0.0
        %262 = vmatpush1.msra.mxu0 0.0
        %263 = vmatprep.subr.mxu0 0.0
        %264 = vmatpush1.msra.mxu0 0.0
        %265 = vmatprep.subr.mxu0 0.0
        %266 = vmatpush1.msra.mxu0 0.0
        %267 = vmatprep.subr.mxu0 0.0
        %268 = vmatpush1.msra.mxu0 0.0
        %269 = vmatprep.mubr.f32.mxu0 0.0
        %270 = vmatmul.mubr.f32.gmra.mrb[0].mxu0 %v181
        %v271 = vpop.f32.mrb[0].mxu0
        %v272 = vadd.f32 %v203, %v271
        %v273 = vpop.f32.mrb[0].mxu0
        %274 = vdwg.mxu0
        %275 = vst [vmem:[%s180] sm:$0xff] %v272
        %p276 = scmp.lt.s32.totalorder %s15, 1
        %s277 = scalar_select %p276, %s15, 1
        %s278 = smul.addr %s277, 8
        %s279 = scalar_lea.vmem %s3, %s278
        // Predicated region
        $region37: #{donut_swin_self_output.1} parent=31 // pred_check
          %p280 = pneg %p101
        $region38: #{donut_swin_self_output.1} parent=31 // pred_check_branch
          %282 = sbr.rel (%p280) target = $region40
        $region39: #{donut_swin_self_output.1} parent=31 // pred_region
          _
        $region40: #{donut_swin_self_output.1} parent=31 // pred_fallthru
          _
      $region32: #{donut_swin_self_output.1} parent=5 // pred_fallthru
        _
      %p283 = scmp.le.s32.totalorder 2, %s10
      // Predicated region
      $region41: #{donut_swin_self_output.1} parent=5 // pred_check
        %p284 = pneg %p283
      $region42: #{donut_swin_self_output.1} parent=5 // pred_check_branch
        %286 = sbr.rel (%p284) target = $region44
      $region43: #{donut_swin_self_output.1} parent=5 // pred_region
        %s287 = ssub.s32 %s10, 2
        // Predicated region
        $region45: #{donut_swin_self_output.1} parent=43 // pred_check
          %p288 = pneg %p107
        $region46: #{donut_swin_self_output.1} parent=43 // pred_check_branch
          %290 = sbr.rel (%p288) target = $region48
        $region47: #{donut_swin_self_output.1} parent=43 // pred_region
          %p291 = scmp.lt.s32.totalorder %s16, 1
          %s292 = scalar_select %p291, %s16, 1
          %s293 = smul.addr %s292, 8
          %s294 = scalar_lea.vmem %s3, %s293
        $region48: #{donut_swin_self_output.1} parent=43 // pred_fallthru
          _
      $region44: #{donut_swin_self_output.1} parent=5 // pred_fallthru
        _
    $region6: #{donut_swin_self_output.1} parent=1 // loop_footer
      %s14 = sadd.s32 1, %s10
    $region7: #{donut_swin_self_output.1} parent=1 // loop_footer_branch
      %9 = sbr.rel target = $region3
    $region8: #{donut_swin_self_output.1} parent=1 // loop_exit
      _
    %295 = vsyncpa [#allocation3], 1
    %s296 = scalar_lea.sflag [#allocation3], 1
    %297 = vsyncpa %s296, 1

</llo_original>
